<compile_context>
chip_gen: v7x
topology: tpu7x:2x2x1
jax: 0.10.0
libtpu: 0.0.40
codegen_flags: <defaults>
</compile_context>

<pallas_src>
import jax
import jax.numpy as jnp
from jax import lax
from jax.experimental import pallas as pl
from jax.experimental.pallas import tpu as pltpu


# ----------------------------------------------------------------------------
# Fused kernel.
# Grid = (T, n_spatial_tiles):
#   axis 0 ("parallel")  : time steps (independent; BN only couples the batch)
#   axis 1 ("arbitrary") : tiles of the B*H*W column axis, pooled sums are
#                          accumulated in a VMEM scratch (init/finalize pl.when)
# ----------------------------------------------------------------------------
def fused_encoder_kernel(patch_ref, pool_ref, wconv_ref, bconv_ref,
                         wlin_ref, blin_ref, gamma_ref, beta_ref,
                         out_ref, acc_ref):
    j = pl.program_id(1)

    @pl.when(j == 0)
    def _init():
        acc_ref[...] = jnp.zeros_like(acc_ref)

    # conv-as-matmul on the MXU: (F, CKK) @ (CKK, TILE) -> (F, TILE).
    # bf16 operands, f32 accumulation; TILE (multiple of 128) is the lane axis
    # so the dominant operand is lane-dense.
    patches = patch_ref[0]                                 # (CKK, TILE) bf16
    conv = jnp.dot(wconv_ref[...], patches,
                   preferred_element_type=jnp.float32)     # (F, TILE) f32
    conv = jnp.maximum(conv + bconv_ref[...], 0.0)         # bias + ReLU

    # Partial global-average-pool, grouped per frame b, as one MXU matmul:
    # pool (B, TILE) contracted with conv (F, TILE) over TILE -> (B, F).
    acc_ref[...] += lax.dot_general(
        pool_ref[...], conv,
        dimension_numbers=(((1,), (1,)), ((), ())),
        preferred_element_type=jnp.float32)

    @pl.when(j == pl.num_programs(1) - 1)
    def _finalize():
        pooled = acc_ref[...]                              # (B, F)
        feat = jnp.dot(pooled, wlin_ref[...],
                       preferred_element_type=jnp.float32) + blin_ref[...]
        # BatchNorm1d, training mode: biased batch statistics over B, eps=1e-5.
        mean = jnp.mean(feat, axis=0, keepdims=True)
        var = jnp.mean((feat - mean) ** 2, axis=0, keepdims=True)
        inv = lax.rsqrt(var + 1e-5)
        out_ref[0] = (feat - mean) * inv * gamma_ref[...] + beta_ref[...]


# ----------------------------------------------------------------------------
# Host-side layout prep (pure data movement) + pallas_call wrapper.
# ----------------------------------------------------------------------------
def _im2col_taps(frames, H, W):
    # frames: (N, C, H, W) -> (N, C, 9, H, W), tap index = di*3 + dj ('same' 3x3)
    xp = jnp.pad(frames, ((0, 0), (0, 0), (1, 1), (1, 1)))
    taps = [xp[:, :, di:di + H, dj:dj + W] for di in range(3) for dj in range(3)]
    return jnp.stack(taps, axis=2)


def encoder_cnn_forward(images, params, *, bhw_tile=256):
    """images: (B, T, C, H, W) f32 -> (B, T, E) f32 (matches torch.stack(dim=1))."""
    B, T, C, H, W = images.shape
    wconv, bconv, wlin, blin, gamma, beta = params
    F = wconv.shape[0]
    E = wlin.shape[0]
    HW = H * W
    BHW = B * HW
    CKK = C * 9
    E_pad = ((E + 127) // 128) * 128            # lane-dense output (>= 128)

    if bhw_tile % 128 != 0 or BHW % bhw_tile != 0:
        bhw_tile = BHW                          # fall back to a single tile
    n_tiles = BHW // bhw_tile

    # --- layout prep (cheap XLA data movement, done once) --------------------
    # TODO(synk): build the 9 conv taps in-kernel from the raw padded frame to
    # cut patch HBM traffic ~9x; host-side im2col is kept here because at these
    # small spatial sizes the required in-kernel relayouts are not worth the
    # lowering risk.
    frames = images.transpose(1, 0, 2, 3, 4).reshape(T * B, C, H, W)
    p = _im2col_taps(frames, H, W)                           # (T*B, C, 9, H, W)
    patches_t = (p.reshape(T, B, CKK, HW)
                   .transpose(0, 2, 1, 3)
                   .reshape(T, CKK, BHW)
                   .astype(jnp.bfloat16))                    # (T, CKK, B*HW)

    wc = wconv.reshape(F, CKK).astype(jnp.bfloat16)          # (F, CKK)
    bc = bconv.reshape(F, 1).astype(jnp.float32)             # (F, 1)
    wl = jnp.zeros((F, E_pad), jnp.float32).at[:, :E].set(wlin.T)
    bl = jnp.zeros((1, E_pad), jnp.float32).at[:, :E].set(blin)
    gm = jnp.ones((1, E_pad), jnp.float32).at[:, :E].set(gamma)
    bt = jnp.zeros((1, E_pad), jnp.float32).at[:, :E].set(beta)

    # Pooling matrix: pool[b, b*HW + p] = 1/HW  (global average pool per frame).
    col_frame = jnp.arange(BHW, dtype=jnp.int32) // HW
    pool = (col_frame[None, :] == jnp.arange(B, dtype=jnp.int32)[:, None]
            ).astype(jnp.float32) * (1.0 / HW)               # (B, B*HW)

    flops = 2 * T * (CKK * F * BHW + B * F * BHW + B * F * E_pad)
    bytes_accessed = (patches_t.size * 2 + wc.size * 2
                      + 4 * (pool.size + bc.size + wl.size + bl.size
                             + gm.size + bt.size + T * B * E_pad))

    out = pl.pallas_call(
        fused_encoder_kernel,
        out_shape=jax.ShapeDtypeStruct((T, B, E_pad), jnp.float32),
        grid_spec=pltpu.PrefetchScalarGridSpec(
            num_scalar_prefetch=0,
            grid=(T, n_tiles),
            in_specs=[
                pl.BlockSpec((1, CKK, bhw_tile), lambda t, j: (t, 0, j)),
                pl.BlockSpec((B, bhw_tile), lambda t, j: (0, j)),
                pl.BlockSpec((F, CKK), lambda t, j: (0, 0)),
                pl.BlockSpec((F, 1), lambda t, j: (0, 0)),
                pl.BlockSpec((F, E_pad), lambda t, j: (0, 0)),
                pl.BlockSpec((1, E_pad), lambda t, j: (0, 0)),
                pl.BlockSpec((1, E_pad), lambda t, j: (0, 0)),
                pl.BlockSpec((1, E_pad), lambda t, j: (0, 0)),
            ],
            out_specs=pl.BlockSpec((1, B, E_pad), lambda t, j: (t, 0, 0)),
            scratch_shapes=[pltpu.VMEM((B, F), jnp.float32)],
        ),
        compiler_params=pltpu.CompilerParams(
            dimension_semantics=("parallel", "arbitrary"),
            vmem_limit_bytes=32 * 1024 * 1024),
        cost_estimate=pl.CostEstimate(
            flops=flops, transcendentals=0, bytes_accessed=bytes_accessed),
    )(patches_t, pool, wc, bc, wl, bl, gm, bt)               # (T, B, E_pad)

    # torch.stack(feat_block, dim=1) -> (B, T, E); drop the lane padding.
    return out[:, :, :E].transpose(1, 0, 2)


# ----------------------------------------------------------------------------
# Pure-JAX reference (same math, same bf16 conv operands) for self-check.
# ----------------------------------------------------------------------------
def encoder_cnn_reference(images, params):
    B, T, C, H, W = images.shape
    wconv, bconv, wlin, blin, gamma, beta = params
    F = wconv.shape[0]
    HW = H * W
    CKK = C * 9
    frames = images.transpose(1, 0, 2, 3, 4).reshape(T * B, C, H, W)
    p = _im2col_taps(frames, H, W)                            # (TB, C, 9, H, W)
    p = p.transpose(0, 3, 4, 1, 2).reshape(T * B, HW, CKK)    # (TB, HW, CKK)
    wc = wconv.reshape(F, CKK)
    conv = jnp.dot(p.astype(jnp.bfloat16), wc.T.astype(jnp.bfloat16),
                   preferred_element_type=jnp.float32) + bconv
    conv = jnp.maximum(conv, 0.0)
    pooled = conv.mean(axis=1)                                # (TB, F)
    feat = pooled @ wlin.T + blin                             # (TB, E)
    feat = feat.reshape(T, B, -1)
    mean = feat.mean(axis=1, keepdims=True)
    var = ((feat - mean) ** 2).mean(axis=1, keepdims=True)
    normed = (feat - mean) * lax.rsqrt(var + 1e-5) * gamma + beta
    return normed.transpose(1, 0, 2)                          # (B, T, E)


if __name__ == "__main__":
    # Small synthetic shapes consistent with the module's forward:
    # images (B, T, C, H, W); F stands in for resnet.fc.in_features, E=embed_size.
    B, T, C, H, W = 2, 3, 4, 16, 16
    F, E = 32, 32

    key = jax.random.PRNGKey(0)
    k_img, k_wc, k_bc, k_wl, k_bl, k_g, k_b = jax.random.split(key, 7)

    images = jax.random.normal(k_img, (B, T, C, H, W), dtype=jnp.float32)

    # Deterministic synthetic parameter init (no checkpoint load).
    wconv = jax.random.normal(k_wc, (F, C, 3, 3), jnp.float32) * 0.1
    bconv = jax.random.normal(k_bc, (F,), jnp.float32) * 0.1
    wlin = jax.random.normal(k_wl, (E, F), jnp.float32) * 0.1   # nn.Linear weight
    blin = jax.random.normal(k_bl, (E,), jnp.float32) * 0.1
    gamma = 1.0 + 0.1 * jax.random.normal(k_g, (E,), jnp.float32)
    beta = 0.1 * jax.random.normal(k_b, (E,), jnp.float32)
    params = (wconv, bconv, wlin, blin, gamma, beta)

    fwd = jax.jit(encoder_cnn_forward)
    out = jax.block_until_ready(fwd(images, params))

    assert out.shape == (B, T, E), out.shape
    ref = encoder_cnn_reference(images, params)
    max_err = float(jnp.max(jnp.abs(out - ref)))
    assert jnp.allclose(out, ref, rtol=5e-3, atol=5e-3), f"mismatch: {max_err}"

    print("KERNEL_OK")
</pallas_src>

<mosaic_0001>
module attributes {stable_mosaic.version = 11 : i64} {
  func.func @fused_encoder_kernel(%arg0: i32, %arg1: i32, %arg2: memref<1x36x256xbf16, #tpu.memory_space<vmem>>, %arg3: memref<2x256xf32, #tpu.memory_space<vmem>>, %arg4: memref<32x36xbf16, #tpu.memory_space<vmem>>, %arg5: memref<32x1xf32, #tpu.memory_space<vmem>>, %arg6: memref<32x128xf32, #tpu.memory_space<vmem>>, %arg7: memref<1x128xf32, #tpu.memory_space<vmem>>, %arg8: memref<1x128xf32, #tpu.memory_space<vmem>>, %arg9: memref<1x128xf32, #tpu.memory_space<vmem>>, %arg10: memref<1x2x128xf32, #tpu.memory_space<vmem>>, %arg11: memref<2x32xf32, #tpu.memory_space<vmem>>) attributes {dimension_semantics = [#tpu.dimension_semantics<parallel>, #tpu.dimension_semantics<arbitrary>], iteration_bounds = array<i64: 3, 2>, scalar_prefetch = 0 : i64, scratch_operands = 1 : i64, tpu.core_type = #tpu.core_type<tc>, window_params = [{transform_indices = @transform_0, window_bounds = array<i64: 1, 36, 256>}, {transform_indices = @transform_1, window_bounds = array<i64: 2, 256>}, {pipeline_mode = #tpu.pipeline_mode<synchronous>, transform_indices = @transform_2, window_bounds = array<i64: 32, 36>}, {pipeline_mode = #tpu.pipeline_mode<synchronous>, transform_indices = @transform_3, window_bounds = array<i64: 32, 1>}, {pipeline_mode = #tpu.pipeline_mode<synchronous>, transform_indices = @transform_4, window_bounds = array<i64: 32, 128>}, {pipeline_mode = #tpu.pipeline_mode<synchronous>, transform_indices = @transform_5, window_bounds = array<i64: 1, 128>}, {pipeline_mode = #tpu.pipeline_mode<synchronous>, transform_indices = @transform_6, window_bounds = array<i64: 1, 128>}, {pipeline_mode = #tpu.pipeline_mode<synchronous>, transform_indices = @transform_7, window_bounds = array<i64: 1, 128>}, {transform_indices = @transform_8, window_bounds = array<i64: 1, 2, 128>}]} {
    %c0_i32 = arith.constant 0 : i32
    %0 = arith.cmpi eq, %arg1, %c0_i32 : i32
    %1 = arith.extui %0 : i1 to i32
    %c0_i32_0 = arith.constant 0 : i32
    %2 = arith.cmpi ne, %1, %c0_i32_0 : i32
    scf.if %2 {
      %cst_16 = arith.constant 0.000000e+00 : f32
      %20 = vector.broadcast %cst_16 : f32 to vector<2x32xf32>
      %c0_17 = arith.constant 0 : index
      %c0_18 = arith.constant 0 : index
      %21 = vector.load %arg11[%c0_17, %c0_18] : memref<2x32xf32, #tpu.memory_space<vmem>>, vector<2x32xf32>
      tpu.vector_store %arg11[%c0_17, %c0_18], %20 {strides = array<i32>} : memref<2x32xf32, #tpu.memory_space<vmem>>, vector<2x32xf32>,
    } else {
    }
    %c0 = arith.constant 0 : index
    %c0_1 = arith.constant 0 : index
    %c0_2 = arith.constant 0 : index
    %3 = vector.load %arg2[%c0, %c0_1, %c0_2] : memref<1x36x256xbf16, #tpu.memory_space<vmem>>, vector<1x36x256xbf16>
    %4 = vector.shape_cast %3 : vector<1x36x256xbf16> to vector<36x256xbf16>
    %c0_3 = arith.constant 0 : index
    %c0_4 = arith.constant 0 : index
    %5 = vector.load %arg4[%c0_3, %c0_4] : memref<32x36xbf16, #tpu.memory_space<vmem>>, vector<32x36xbf16>
    %cst = arith.constant dense<0.000000e+00> : vector<32x256xf32>
    %6 = tpu.matmul %5, %4, %cst {dimension_numbers = #tpu.dot_dimension_numbers<[1], [0], [0], [1], [0, 0, 1, 1], [], []>} : vector<32x36xbf16>, vector<36x256xbf16>, vector<32x256xf32> -> vector<32x256xf32>
    %c0_5 = arith.constant 0 : index
    %c0_6 = arith.constant 0 : index
    %7 = vector.load %arg5[%c0_5, %c0_6] : memref<32x1xf32, #tpu.memory_space<vmem>>, vector<32x1xf32>
    %8 = vector.broadcast %7 : vector<32x1xf32> to vector<32x256xf32>
    %9 = arith.addf %6, %8 : vector<32x256xf32>
    %cst_7 = arith.constant 0.000000e+00 : f32
    %10 = vector.broadcast %cst_7 : f32 to vector<32x256xf32>
    %11 = arith.maximumf %9, %10 : vector<32x256xf32>
    %c0_8 = arith.constant 0 : index
    %c0_9 = arith.constant 0 : index
    %12 = vector.load %arg11[%c0_8, %c0_9] : memref<2x32xf32, #tpu.memory_space<vmem>>, vector<2x32xf32>
    %c0_10 = arith.constant 0 : index
    %c0_11 = arith.constant 0 : index
    %13 = vector.load %arg3[%c0_10, %c0_11] : memref<2x256xf32, #tpu.memory_space<vmem>>, vector<2x256xf32>
    %cst_12 = arith.constant dense<0.000000e+00> : vector<2x32xf32>
    %14 = tpu.matmul %13, %11, %cst_12 {dimension_numbers = #tpu.dot_dimension_numbers<[1], [1], [0], [0], [0, 0, 1, 0], [], []>} : vector<2x256xf32>, vector<32x256xf32>, vector<2x32xf32> -> vector<2x32xf32>
    %15 = arith.addf %12, %14 : vector<2x32xf32>
    %c0_13 = arith.constant 0 : index
    %c0_14 = arith.constant 0 : index
    %16 = vector.load %arg11[%c0_13, %c0_14] : memref<2x32xf32, #tpu.memory_space<vmem>>, vector<2x32xf32>
    tpu.vector_store %arg11[%c0_13, %c0_14], %15 {strides = array<i32>} : memref<2x32xf32, #tpu.memory_space<vmem>>, vector<2x32xf32>,
    %c1_i32 = arith.constant 1 : i32
    %17 = arith.cmpi eq, %arg1, %c1_i32 : i32
    %18 = arith.extui %17 : i1 to i32
    %c0_i32_15 = arith.constant 0 : i32
    %19 = arith.cmpi ne, %18, %c0_i32_15 : i32
    scf.if %19 {
      %c0_16 = arith.constant 0 : index
      %c0_17 = arith.constant 0 : index
      %20 = vector.load %arg11[%c0_16, %c0_17] : memref<2x32xf32, #tpu.memory_space<vmem>>, vector<2x32xf32>
      %c0_18 = arith.constant 0 : index
      %c0_19 = arith.constant 0 : index
      %21 = vector.load %arg6[%c0_18, %c0_19] : memref<32x128xf32, #tpu.memory_space<vmem>>, vector<32x128xf32>
      %cst_20 = arith.constant dense<0.000000e+00> : vector<2x128xf32>
      %22 = tpu.matmul %20, %21, %cst_20 {dimension_numbers = #tpu.dot_dimension_numbers<[1], [0], [0], [1], [0, 0, 1, 1], [], []>} : vector<2x32xf32>, vector<32x128xf32>, vector<2x128xf32> -> vector<2x128xf32>
      %c0_21 = arith.constant 0 : index
      %c0_22 = arith.constant 0 : index
      %23 = vector.load %arg7[%c0_21, %c0_22] : memref<1x128xf32, #tpu.memory_space<vmem>>, vector<1x128xf32>
      %24 = vector.broadcast %23 : vector<1x128xf32> to vector<2x128xf32>
      %25 = arith.addf %22, %24 : vector<2x128xf32>
      %cst_23 = arith.constant dense<0.000000e+00> : vector<128xf32>
      %26 = vector.multi_reduction <add>, %25, %cst_23 [0] : vector<2x128xf32> to vector<128xf32>
      %27 = vector.shape_cast %26 : vector<128xf32> to vector<1x128xf32>
      %cst_24 = arith.constant 2.000000e+00 : f32
      %28 = vector.broadcast %cst_24 : f32 to vector<1x128xf32>
      %29 = arith.divf %27, %28 : vector<1x128xf32>
      %30 = vector.broadcast %29 : vector<1x128xf32> to vector<2x128xf32>
      %31 = arith.subf %25, %30 : vector<2x128xf32>
      %32 = arith.mulf %31, %31 : vector<2x128xf32>
      %cst_25 = arith.constant dense<0.000000e+00> : vector<128xf32>
      %33 = vector.multi_reduction <add>, %32, %cst_25 [0] : vector<2x128xf32> to vector<128xf32>
      %34 = vector.shape_cast %33 : vector<128xf32> to vector<1x128xf32>
      %cst_26 = arith.constant 2.000000e+00 : f32
      %35 = vector.broadcast %cst_26 : f32 to vector<1x128xf32>
      %36 = arith.divf %34, %35 : vector<1x128xf32>
      %cst_27 = arith.constant 9.99999974E-6 : f32
      %37 = vector.broadcast %cst_27 : f32 to vector<1x128xf32>
      %38 = arith.addf %36, %37 : vector<1x128xf32>
      %39 = math.rsqrt %38 : vector<1x128xf32>
      %40 = vector.broadcast %29 : vector<1x128xf32> to vector<2x128xf32>
      %41 = arith.subf %25, %40 : vector<2x128xf32>
      %42 = vector.broadcast %39 : vector<1x128xf32> to vector<2x128xf32>
      %43 = arith.mulf %41, %42 : vector<2x128xf32>
      %c0_28 = arith.constant 0 : index
      %c0_29 = arith.constant 0 : index
      %44 = vector.load %arg8[%c0_28, %c0_29] : memref<1x128xf32, #tpu.memory_space<vmem>>, vector<1x128xf32>
      %45 = vector.broadcast %44 : vector<1x128xf32> to vector<2x128xf32>
      %46 = arith.mulf %43, %45 : vector<2x128xf32>
      %c0_30 = arith.constant 0 : index
      %c0_31 = arith.constant 0 : index
      %47 = vector.load %arg9[%c0_30, %c0_31] : memref<1x128xf32, #tpu.memory_space<vmem>>, vector<1x128xf32>
      %48 = vector.broadcast %47 : vector<1x128xf32> to vector<2x128xf32>
      %49 = arith.addf %46, %48 : vector<2x128xf32>
      %c0_32 = arith.constant 0 : index
      %c0_33 = arith.constant 0 : index
      %c0_34 = arith.constant 0 : index
      %50 = vector.load %arg10[%c0_32, %c0_33, %c0_34] : memref<1x2x128xf32, #tpu.memory_space<vmem>>, vector<1x2x128xf32>
      %51 = vector.shape_cast %50 : vector<1x2x128xf32> to vector<2x128xf32>
      %52 = vector.shape_cast %49 : vector<2x128xf32> to vector<1x2x128xf32>
      tpu.vector_store %arg10[%c0_32, %c0_33, %c0_34], %52 {strides = array<i32>} : memref<1x2x128xf32, #tpu.memory_space<vmem>>, vector<1x2x128xf32>,
    } else {
    }
    return
  }
  func.func @transform_0(%arg0: i32, %arg1: i32) -> (i32, i32, i32) {
    %c0_i32 = arith.constant 0 : i32
    %c0_i32_0 = arith.constant 0 : i32
    return %arg0, %c0_i32, %arg1 : i32, i32, i32
  }
  func.func @transform_1(%arg0: i32, %arg1: i32) -> (i32, i32) {
    %c0_i32 = arith.constant 0 : i32
    %c0_i32_0 = arith.constant 0 : i32
    return %c0_i32, %arg1 : i32, i32
  }
  func.func @transform_2(%arg0: i32, %arg1: i32) -> (i32, i32) {
    %c0_i32 = arith.constant 0 : i32
    %c0_i32_0 = arith.constant 0 : i32
    %c0_i32_1 = arith.constant 0 : i32
    return %c0_i32, %c0_i32_0 : i32, i32
  }
  func.func @transform_3(%arg0: i32, %arg1: i32) -> (i32, i32) {
    %c0_i32 = arith.constant 0 : i32
    %c0_i32_0 = arith.constant 0 : i32
    %c0_i32_1 = arith.constant 0 : i32
    return %c0_i32, %c0_i32_0 : i32, i32
  }
  func.func @transform_4(%arg0: i32, %arg1: i32) -> (i32, i32) {
    %c0_i32 = arith.constant 0 : i32
    %c0_i32_0 = arith.constant 0 : i32
    %c0_i32_1 = arith.constant 0 : i32
    return %c0_i32, %c0_i32_0 : i32, i32
  }
  func.func @transform_5(%arg0: i32, %arg1: i32) -> (i32, i32) {
    %c0_i32 = arith.constant 0 : i32
    %c0_i32_0 = arith.constant 0 : i32
    %c0_i32_1 = arith.constant 0 : i32
    return %c0_i32, %c0_i32_0 : i32, i32
  }
  func.func @transform_6(%arg0: i32, %arg1: i32) -> (i32, i32) {
    %c0_i32 = arith.constant 0 : i32
    %c0_i32_0 = arith.constant 0 : i32
    %c0_i32_1 = arith.constant 0 : i32
    return %c0_i32, %c0_i32_0 : i32, i32
  }
  func.func @transform_7(%arg0: i32, %arg1: i32) -> (i32, i32) {
    %c0_i32 = arith.constant 0 : i32
    %c0_i32_0 = arith.constant 0 : i32
    %c0_i32_1 = arith.constant 0 : i32
    return %c0_i32, %c0_i32_0 : i32, i32
  }
  func.func @transform_8(%arg0: i32, %arg1: i32) -> (i32, i32, i32) {
    %c0_i32 = arith.constant 0 : i32
    %c0_i32_0 = arith.constant 0 : i32
    %c0_i32_1 = arith.constant 0 : i32
    return %arg0, %c0_i32, %c0_i32_0 : i32, i32, i32
  }
}

</mosaic_0001>

<llo_original>
// kernel: encoder_cnn_forward.1
$region0: #{encoder_cnn_forward.1}
  #allocation0 [shape = 'u32[]', space=smem, size = 0x4, offset = 0x4, fixed_abs, tag = 'smem constant byte address 0x4 - core index']
  #allocation1 [shape = 'u32[144,128]{1,0:T(1,128)}', space=vmem, size = 0x12000, scoped, tag = 'internal scratch']
  #allocation2 [shape = 'f32[2,32]{1,0:T(2,128)}', space=vmem, size = 0x400, scoped, tag = 'scratch operand']
  %s0 = inlined_call_operand.vmem [shape: bf16[3,36,512], index: 0, kind: input, shape index: {}]
  %s1 = inlined_call_operand.vmem [shape: f32[2,512], index: 1, kind: input, shape index: {}]
  %s2 = inlined_call_operand.vmem [shape: bf16[32,36], index: 2, kind: input, shape index: {}]
  %s3 = inlined_call_operand.vmem [shape: f32[32,1], index: 3, kind: input, shape index: {}]
  %s4 = inlined_call_operand.vmem [shape: f32[32,128], index: 4, kind: input, shape index: {}]
  %s5 = inlined_call_operand.vmem [shape: f32[1,128], index: 5, kind: input, shape index: {}]
  %s6 = inlined_call_operand.vmem [shape: f32[1,128], index: 6, kind: input, shape index: {}]
  %s7 = inlined_call_operand.vmem [shape: f32[1,128], index: 7, kind: input, shape index: {}]
  %s8 = inlined_call_operand.vmem [shape: f32[3,2,128], index: 8, kind: output, shape index: {}]
  %s9 = sld [smem:[#allocation0]]
  $region111: #{encoder_cnn_forward.1} parent=0
    _
  %s11 = ssub.s32 1, %s9
  %s12 = scalar_select 0, %s11, %s9
  $region1: #{encoder_cnn_forward.1} parent=0
    #allocation3 [shape = 'u8[40960]{0}', space=vmem, size = 0xa000, scoped, tag = 'input window, operand 0']
    loop: start=0, step=1, limit=8
    $region2: #{encoder_cnn_forward.1} parent=1 // loop_pre_header
      _
    $region3: #{encoder_cnn_forward.1} parent=1 // loop_header
      %s14 = sphi 0, %s18
      %p15 = scmp.ge.s32.totalorder %s14, 8
      %s21 = sphi 0, %s33
      %s22 = sphi 0, %s29
      %s23 = sphi 0, %s21
      %s24 = sphi 0, %s22
      %s25 = sphi 0, %s23
      %s26 = sphi 0, %s24
      %s38 = sphi 0, %s40
      %s41 = sphi 0, %s38
      %s42 = sphi 0, %s41
      %s58 = sphi 0, %s42
      %s64 = sphi 0, %s66
      %s67 = sphi 0, %s64
      %s68 = sphi 0, %s67
      %s84 = sphi 0, %s68
      %s88 = sphi 0, %s88
      %s90 = sphi 0, %s88
      %s91 = sphi 0, %s90
      %s105 = sphi 0, %s91
      %s109 = sphi 0, %s109
      %s111 = sphi 0, %s109
      %s112 = sphi 0, %s111
      %s126 = sphi 0, %s112
      %s130 = sphi 0, %s130
      %s132 = sphi 0, %s130
      %s133 = sphi 0, %s132
      %s147 = sphi 0, %s133
      %s151 = sphi 0, %s151
      %s153 = sphi 0, %s151
      %s154 = sphi 0, %s153
      %s168 = sphi 0, %s154
      %s172 = sphi 0, %s172
      %s174 = sphi 0, %s172
      %s175 = sphi 0, %s174
      %s189 = sphi 0, %s175
      %s193 = sphi 0, %s193
      %s195 = sphi 0, %s193
      %s196 = sphi 0, %s195
      %s210 = sphi 0, %s196
      %s216 = sphi 0, %s218
      %s219 = sphi 0, %s216
      %s220 = sphi 0, %s219
      %s236 = sphi 0, %s220
    $region4: #{encoder_cnn_forward.1} parent=1 // loop_header_branch
      %17 = sbr.rel (%p15) target = $region8
    $region5: #{encoder_cnn_forward.1} parent=1 // loop_body
      %s19 = ssub.s32 %s14, 1
      %s20 = ssub.s32 %s14, 2
      %s27 = sadd.s32 1, %s22
      %p28 = scmp.ge.s32.totalorder %s27, 2
      %s29 = scalar_select %p28, 0, %s27
      %s30 = sadd.s32 1, %s21
      %s31 = scalar_select %p28, %s30, %s21
      %p32 = scmp.ge.s32.totalorder %s31, 3
      %s33 = scalar_select %p32, 0, %s31
      %s34 = ssub.s32 %s21, %s33
      %s35 = ssub.s32 %s22, %s29
      %s36 = sor.u32 %s34, %s35
      %p37 = scmp.eq.s32.totalorder %s36, 0
      %s39 = sadd.s32 %s38, 1
      %s40 = scalar_select %p37, %s38, %s39
      %p43 = pneg %p37
      %p44 = scmp.eq.s32.totalorder %s14, 5
      %p45 = por %p43, %p44
      %p46 = scmp.ne.s32.totalorder %s38, %s41
      %p47 = scmp.eq.s32.totalorder %s14, 0
      %p48 = por %p46, %p47
      %p49 = scmp.ne.s32.totalorder %s38, %s41
      %p50 = scmp.eq.s32.totalorder %s19, 5
      %p51 = por %p49, %p50
      %p52 = scmp.ne.s32.totalorder %s41, %s42
      %p53 = scmp.eq.s32.totalorder %s19, 0
      %p54 = por %p52, %p53
      %p55 = scmp.ne.s32.totalorder %s41, %s42
      %p56 = scmp.eq.s32.totalorder %s20, 5
      %p57 = por %p55, %p56
      %p59 = scmp.ne.s32.totalorder %s42, %s58
      %p60 = scmp.eq.s32.totalorder %s20, 0
      %p61 = por %p59, %p60
      %s62 = ssub.s32 %s22, %s29
      %p63 = scmp.eq.s32.totalorder %s62, 0
      %s65 = sadd.s32 %s64, 1
      %s66 = scalar_select %p63, %s64, %s65
      %p69 = pneg %p63
      %p70 = scmp.eq.s32.totalorder %s14, 5
      %p71 = por %p69, %p70
      %p72 = scmp.ne.s32.totalorder %s64, %s67
      %p73 = scmp.eq.s32.totalorder %s14, 0
      %p74 = por %p72, %p73
      %p75 = scmp.ne.s32.totalorder %s64, %s67
      %p76 = scmp.eq.s32.totalorder %s19, 5
      %p77 = por %p75, %p76
      %p78 = scmp.ne.s32.totalorder %s67, %s68
      %p79 = scmp.eq.s32.totalorder %s19, 0
      %p80 = por %p78, %p79
      %p81 = scmp.ne.s32.totalorder %s67, %s68
      %p82 = scmp.eq.s32.totalorder %s20, 5
      %p83 = por %p81, %p82
      %p85 = scmp.ne.s32.totalorder %s68, %s84
      %p86 = scmp.eq.s32.totalorder %s20, 0
      %p87 = por %p85, %p86
      %s89 = sadd.s32 %s88, 1
      %p92 = scmp.eq.s32.totalorder %s14, 5
      %p93 = scmp.ne.s32.totalorder %s88, %s90
      %p94 = scmp.eq.s32.totalorder %s14, 0
      %p95 = por %p93, %p94
      %p96 = scmp.ne.s32.totalorder %s88, %s90
      %p97 = scmp.eq.s32.totalorder %s19, 5
      %p98 = por %p96, %p97
      %p99 = scmp.ne.s32.totalorder %s90, %s91
      %p100 = scmp.eq.s32.totalorder %s19, 0
      %p101 = por %p99, %p100
      %p102 = scmp.ne.s32.totalorder %s90, %s91
      %p103 = scmp.eq.s32.totalorder %s20, 5
      %p104 = por %p102, %p103
      %p106 = scmp.ne.s32.totalorder %s91, %s105
      %p107 = scmp.eq.s32.totalorder %s20, 0
      %p108 = por %p106, %p107
      %s110 = sadd.s32 %s109, 1
      %p113 = scmp.eq.s32.totalorder %s14, 5
      %p114 = scmp.ne.s32.totalorder %s109, %s111
      %p115 = scmp.eq.s32.totalorder %s14, 0
      %p116 = por %p114, %p115
      %p117 = scmp.ne.s32.totalorder %s109, %s111
      %p118 = scmp.eq.s32.totalorder %s19, 5
      %p119 = por %p117, %p118
      %p120 = scmp.ne.s32.totalorder %s111, %s112
      %p121 = scmp.eq.s32.totalorder %s19, 0
      %p122 = por %p120, %p121
      %p123 = scmp.ne.s32.totalorder %s111, %s112
      %p124 = scmp.eq.s32.totalorder %s20, 5
      %p125 = por %p123, %p124
      %p127 = scmp.ne.s32.totalorder %s112, %s126
      %p128 = scmp.eq.s32.totalorder %s20, 0
      %p129 = por %p127, %p128
      %s131 = sadd.s32 %s130, 1
      %p134 = scmp.eq.s32.totalorder %s14, 5
      %p135 = scmp.ne.s32.totalorder %s130, %s132
      %p136 = scmp.eq.s32.totalorder %s14, 0
      %p137 = por %p135, %p136
      %p138 = scmp.ne.s32.totalorder %s130, %s132
      %p139 = scmp.eq.s32.totalorder %s19, 5
      %p140 = por %p138, %p139
      %p141 = scmp.ne.s32.totalorder %s132, %s133
      %p142 = scmp.eq.s32.totalorder %s19, 0
      %p143 = por %p141, %p142
      %p144 = scmp.ne.s32.totalorder %s132, %s133
      %p145 = scmp.eq.s32.totalorder %s20, 5
      %p146 = por %p144, %p145
      %p148 = scmp.ne.s32.totalorder %s133, %s147
      %p149 = scmp.eq.s32.totalorder %s20, 0
      %p150 = por %p148, %p149
      %s152 = sadd.s32 %s151, 1
      %p155 = scmp.eq.s32.totalorder %s14, 5
      %p156 = scmp.ne.s32.totalorder %s151, %s153
      %p157 = scmp.eq.s32.totalorder %s14, 0
      %p158 = por %p156, %p157
      %p159 = scmp.ne.s32.totalorder %s151, %s153
      %p160 = scmp.eq.s32.totalorder %s19, 5
      %p161 = por %p159, %p160
      %p162 = scmp.ne.s32.totalorder %s153, %s154
      %p163 = scmp.eq.s32.totalorder %s19, 0
      %p164 = por %p162, %p163
      %p165 = scmp.ne.s32.totalorder %s153, %s154
      %p166 = scmp.eq.s32.totalorder %s20, 5
      %p167 = por %p165, %p166
      %p169 = scmp.ne.s32.totalorder %s154, %s168
      %p170 = scmp.eq.s32.totalorder %s20, 0
      %p171 = por %p169, %p170
      %s173 = sadd.s32 %s172, 1
      %p176 = scmp.eq.s32.totalorder %s14, 5
      %p177 = scmp.ne.s32.totalorder %s172, %s174
      %p178 = scmp.eq.s32.totalorder %s14, 0
      %p179 = por %p177, %p178
      %p180 = scmp.ne.s32.totalorder %s172, %s174
      %p181 = scmp.eq.s32.totalorder %s19, 5
      %p182 = por %p180, %p181
      %p183 = scmp.ne.s32.totalorder %s174, %s175
      %p184 = scmp.eq.s32.totalorder %s19, 0
      %p185 = por %p183, %p184
      %p186 = scmp.ne.s32.totalorder %s174, %s175
      %p187 = scmp.eq.s32.totalorder %s20, 5
      %p188 = por %p186, %p187
      %p190 = scmp.ne.s32.totalorder %s175, %s189
      %p191 = scmp.eq.s32.totalorder %s20, 0
      %p192 = por %p190, %p191
      %s194 = sadd.s32 %s193, 1
      %p197 = scmp.eq.s32.totalorder %s14, 5
      %p198 = scmp.ne.s32.totalorder %s193, %s195
      %p199 = scmp.eq.s32.totalorder %s14, 0
      %p200 = por %p198, %p199
      %p201 = scmp.ne.s32.totalorder %s193, %s195
      %p202 = scmp.eq.s32.totalorder %s19, 5
      %p203 = por %p201, %p202
      %p204 = scmp.ne.s32.totalorder %s195, %s196
      %p205 = scmp.eq.s32.totalorder %s19, 0
      %p206 = por %p204, %p205
      %p207 = scmp.ne.s32.totalorder %s195, %s196
      %p208 = scmp.eq.s32.totalorder %s20, 5
      %p209 = por %p207, %p208
      %p211 = scmp.ne.s32.totalorder %s196, %s210
      %p212 = scmp.eq.s32.totalorder %s20, 0
      %p213 = por %p211, %p212
      %s214 = ssub.s32 %s21, %s33
      %p215 = scmp.eq.s32.totalorder %s214, 0
      %s217 = sadd.s32 %s216, 1
      %s218 = scalar_select %p215, %s216, %s217
      %p221 = pneg %p215
      %p222 = scmp.eq.s32.totalorder %s14, 5
      %p223 = por %p221, %p222
      %p224 = scmp.ne.s32.totalorder %s216, %s219
      %p225 = scmp.eq.s32.totalorder %s14, 0
      %p226 = por %p224, %p225
      %p227 = scmp.ne.s32.totalorder %s216, %s219
      %p228 = scmp.eq.s32.totalorder %s19, 5
      %p229 = por %p227, %p228
      %p230 = scmp.ne.s32.totalorder %s219, %s220
      %p231 = scmp.eq.s32.totalorder %s19, 0
      %p232 = por %p230, %p231
      %p233 = scmp.ne.s32.totalorder %s219, %s220
      %p234 = scmp.eq.s32.totalorder %s20, 5
      %p235 = por %p233, %p234
      %p237 = scmp.ne.s32.totalorder %s220, %s236
      %p238 = scmp.eq.s32.totalorder %s20, 0
      %p239 = por %p237, %p238
      %p240 = scmp.le.s32.totalorder 1, %s14
      %p241 = scmp.lt.s32.totalorder %s14, 7
      %p242 = pnand %p240, %p241
      %p243 = pneg %p242
      // Predicated region
      $region9: #{encoder_cnn_forward.1} parent=5 // pred_check
        _
      $region10: #{encoder_cnn_forward.1} parent=5 // pred_check_branch
        %245 = sbr.rel (%p242) target = $region12
      $region11: #{encoder_cnn_forward.1} parent=5 // pred_region
        %s246 = ssub.s32 %s14, 1
        // Predicated region
        $region13: #{encoder_cnn_forward.1} parent=11 // pred_check
          %p247 = pneg %p101
        $region14: #{encoder_cnn_forward.1} parent=11 // pred_check_branch
          %249 = sbr.rel (%p247) target = $region16
        $region15: #{encoder_cnn_forward.1} parent=11 // pred_region
          _
        $region16: #{encoder_cnn_forward.1} parent=11 // pred_fallthru
          _
        // Predicated region
        $region17: #{encoder_cnn_forward.1} parent=11 // pred_check
          %p250 = pneg %p122
        $region18: #{encoder_cnn_forward.1} parent=11 // pred_check_branch
          %252 = sbr.rel (%p250) target = $region20
        $region19: #{encoder_cnn_forward.1} parent=11 // pred_region
          _
        $region20: #{encoder_cnn_forward.1} parent=11 // pred_fallthru
          _
        // Predicated region
        $region21: #{encoder_cnn_forward.1} parent=11 // pred_check
          %p253 = pneg %p143
        $region22: #{encoder_cnn_forward.1} parent=11 // pred_check_branch
          %255 = sbr.rel (%p253) target = $region24
        $region23: #{encoder_cnn_forward.1} parent=11 // pred_region
          _
        $region24: #{encoder_cnn_forward.1} parent=11 // pred_fallthru
          _
        // Predicated region
        $region25: #{encoder_cnn_forward.1} parent=11 // pred_check
          %p256 = pneg %p164
        $region26: #{encoder_cnn_forward.1} parent=11 // pred_check_branch
          %258 = sbr.rel (%p256) target = $region28
        $region27: #{encoder_cnn_forward.1} parent=11 // pred_region
          _
        $region28: #{encoder_cnn_forward.1} parent=11 // pred_fallthru
          _
        // Predicated region
        $region29: #{encoder_cnn_forward.1} parent=11 // pred_check
          %p259 = pneg %p185
        $region30: #{encoder_cnn_forward.1} parent=11 // pred_check_branch
          %261 = sbr.rel (%p259) target = $region32
        $region31: #{encoder_cnn_forward.1} parent=11 // pred_region
          _
        $region32: #{encoder_cnn_forward.1} parent=11 // pred_fallthru
          _
        // Predicated region
        $region33: #{encoder_cnn_forward.1} parent=11 // pred_check
          %p262 = pneg %p206
        $region34: #{encoder_cnn_forward.1} parent=11 // pred_check_branch
          %264 = sbr.rel (%p262) target = $region36
        $region35: #{encoder_cnn_forward.1} parent=11 // pred_region
          _
        $region36: #{encoder_cnn_forward.1} parent=11 // pred_fallthru
          _
      $region12: #{encoder_cnn_forward.1} parent=5 // pred_fallthru
        _
      %p265 = scmp.lt.s32.totalorder %s14, 6
      // Predicated region
      $region37: #{encoder_cnn_forward.1} parent=5 // pred_check
        %p266 = pneg %p265
      $region38: #{encoder_cnn_forward.1} parent=5 // pred_check_branch
        %268 = sbr.rel (%p266) target = $region40
      $region39: #{encoder_cnn_forward.1} parent=5 // pred_region
        // Predicated region
        $region41: #{encoder_cnn_forward.1} parent=39 // pred_check
          %p269 = pneg %p48
        $region42: #{encoder_cnn_forward.1} parent=39 // pred_check_branch
          %271 = sbr.rel (%p269) target = $region44
        $region43: #{encoder_cnn_forward.1} parent=39 // pred_region
          %s272 = sand.u32 %s38, 1
          %s273 = sand.u32 %s38, 1
          %s274 = smul.addr %s273, 40
          %s275 = scalar_lea.vmem [#allocation3], %s274
          %s276 = smul.u32 2, %s22
          %s277 = smul.addr %s21, 20
          %s278 = sadd.s32 %s276, %s277
          %s279 = smul.addr %s278, 4
          %s280 = scalar_lea.vmem %s0, %s279
          // Predicated region
          $region45: #{encoder_cnn_forward.1} parent=43 // pred_check
            _
          $region46: #{encoder_cnn_forward.1} parent=43 // pred_check_branch
            %282 = sbr.rel (0) target = $region48
          $region47: #{encoder_cnn_forward.1} parent=43 // pred_region
            // Predicated region
            $region49: #{encoder_cnn_forward.1} parent=47 // pred_check
              _
            $region50: #{encoder_cnn_forward.1} parent=47 // pred_check_branch
              %284 = sbr.rel (0) target = $region52
            $region51: #{encoder_cnn_forward.1} parent=47 // pred_region
              // Predicated region
              $region64: #{encoder_cnn_forward.1} parent=51 // pred_check
                _
              $region65: #{encoder_cnn_forward.1} parent=51 // pred_check_branch
                %307 = sbr.rel (0) target = $region67
              $region66: #{encoder_cnn_forward.1} parent=51 // pred_region
                loop: start=0, step=1, limit=1
                $region68: #{encoder_cnn_forward.1} parent=66 // loop_pre_header
                  _
                $region69: #{encoder_cnn_forward.1} parent=66 // loop_header
                  %s309 = sphi 0, %s313
                  %p310 = scmp.ge.s32.totalorder %s309, 1
                  %s314 = sphi %s280, %s280
                  %s315 = sphi %s275, %s275
                $region70: #{encoder_cnn_forward.1} parent=66 // loop_header_branch
                  %312 = sbr.rel (%p310) target = $region74
                $region71: #{encoder_cnn_forward.1} parent=66 // loop_body
                  %v316 = vld [vmem:[%s314] sm:$0xff]
                  %317 = vst [vmem:[%s315] sm:$0xff] %v316
                  %v318 = vld [vmem:[%s314 + $0x10] sm:$0xff]
                  %319 = vst [vmem:[%s315 + $0x8] sm:$0xff] %v318
                  %v320 = vld [vmem:[%s314 + $0x20] sm:$0xff]
                  %321 = vst [vmem:[%s315 + $0x10] sm:$0xff] %v320
                  %v322 = vld [vmem:[%s314 + $0x30] sm:$0xff]
                  %323 = vst [vmem:[%s315 + $0x18] sm:$0xff] %v322
                  %v324 = vld [vmem:[%s314 + $0x40] sm:$0xff]
                  %325 = vst [vmem:[%s315 + $0x20] sm:$0xff] %v324
                $region72: #{encoder_cnn_forward.1} parent=66 // loop_footer
                  %s313 = sadd.s32 1, %s309
                $region73: #{encoder_cnn_forward.1} parent=66 // loop_footer_branch
                  %308 = sbr.rel target = $region69
                $region74: #{encoder_cnn_forward.1} parent=66 // loop_exit
                  _
              $region67: #{encoder_cnn_forward.1} parent=51 // pred_fallthru
                _
              // Predicated region
              $region75: #{encoder_cnn_forward.1} parent=51 // pred_check
                _
              $region76: #{encoder_cnn_forward.1} parent=51 // pred_check_branch
                %327 = sbr.rel target = $region78
              $region77: #{encoder_cnn_forward.1} parent=51 // pred_region
                _
              $region78: #{encoder_cnn_forward.1} parent=51 // pred_fallthru
                _
            $region52: #{encoder_cnn_forward.1} parent=47 // pred_fallthru
              _
            // Predicated region
            $region53: #{encoder_cnn_forward.1} parent=47 // pred_check
              _
            $region54: #{encoder_cnn_forward.1} parent=47 // pred_check_branch
              %286 = sbr.rel target = $region56
            $region55: #{encoder_cnn_forward.1} parent=47 // pred_region
              loop: start=0, step=1, limit=1
              $region57: #{encoder_cnn_forward.1} parent=55 // loop_pre_header
                _
              $region58: #{encoder_cnn_forward.1} parent=55 // loop_header
                %s289 = sphi 0, %s293
                %p290 = scmp.ge.s32.totalorder %s289, 1
                %s294 = sphi %s280, %s280
                %s295 = sphi %s275, %s275
              $region59: #{encoder_cnn_forward.1} parent=55 // loop_header_branch
                %292 = sbr.rel (%p290) target = $region63
              $region60: #{encoder_cnn_forward.1} parent=55 // loop_body
                %v296 = vld [vmem:[%s294] sm:$0xff]
                %297 = vst [vmem:[%s295] sm:$0xff] %v296
                %v298 = vld [vmem:[%s294 + $0x10] sm:$0xff]
                %299 = vst [vmem:[%s295 + $0x8] sm:$0xff] %v298
                %v300 = vld [vmem:[%s294 + $0x20] sm:$0xff]
                %301 = vst [vmem:[%s295 + $0x10] sm:$0xff] %v300
                %v302 = vld [vmem:[%s294 + $0x30] sm:$0xff]
                %303 = vst [vmem:[%s295 + $0x18] sm:$0xff] %v302
                %v304 = vld [vmem:[%s294 + $0x40] sm:$0xff]
                %305 = vst [vmem:[%s295 + $0x20] sm:$0xff] %v304
              $region61: #{encoder_cnn_forward.1} parent=55 // loop_footer
                %s293 = sadd.s32 1, %s289
              $region62: #{encoder_cnn_forward.1} parent=55 // loop_footer_branch
                %288 = sbr.rel target = $region58
              $region63: #{encoder_cnn_forward.1} parent=55 // loop_exit
                _
            $region56: #{encoder_cnn_forward.1} parent=47 // pred_fallthru
              _
          $region48: #{encoder_cnn_forward.1} parent=43 // pred_fallthru
            _
          %328 = vnop
        $region44: #{encoder_cnn_forward.1} parent=39 // pred_fallthru
          _
        // Predicated region
        $region79: #{encoder_cnn_forward.1} parent=39 // pred_check
          %p329 = pneg %p74
        $region80: #{encoder_cnn_forward.1} parent=39 // pred_check_branch
          %331 = sbr.rel (%p329) target = $region82
        $region81: #{encoder_cnn_forward.1} parent=39 // pred_region
          %s332 = smul.u32 2, %s22
          %p333 = scmp.lt.s32.totalorder %s332, 3
          %s334 = scalar_select %p333, %s332, 3
          %s335 = smul.addr %s334, 2
          %s336 = scalar_lea.vmem %s1, %s335
          %s337 = smul.u32 2, %s22
        $region82: #{encoder_cnn_forward.1} parent=39 // pred_fallthru
          _
      $region40: #{encoder_cnn_forward.1} parent=5 // pred_fallthru
        _
      %p338 = scmp.le.s32.totalorder 1, %s14
      %p339 = scmp.lt.s32.totalorder %s14, 7
      %p340 = pnand %p338, %p339
      %p341 = pneg %p340
      // Predicated region
      $region83: #{encoder_cnn_forward.1} parent=5 // pred_check
        _
      $region84: #{encoder_cnn_forward.1} parent=5 // pred_check_branch
        %343 = sbr.rel (%p340) target = $region86
      $region85: #{encoder_cnn_forward.1} parent=5 // pred_region
        %s344 = ssub.s32 %s14, 1
        %s345 = sand.u32 %s41, 1
        %s346 = sand.u32 %s41, 1
        %s347 = smul.addr %s346, 40
        %s348 = scalar_lea.vmem [#allocation3], %s347
        // Predicated region
        $region87: #{encoder_cnn_forward.1} parent=85 // pred_check
          %p349 = pneg %p54
        $region88: #{encoder_cnn_forward.1} parent=85 // pred_check_branch
          %351 = sbr.rel (%p349) target = $region90
        $region89: #{encoder_cnn_forward.1} parent=85 // pred_region
          _
        $region90: #{encoder_cnn_forward.1} parent=85 // pred_fallthru
          _
        %s352 = sand.u32 %s41, 1
        %s353 = sand.u32 %s41, 1
        %s354 = smul.addr %s353, 40
        %s355 = scalar_lea.vmem [#allocation3], %s354
        %p356 = pneg %p54
        %p357 = pneg %p51
        %s358 = smul.u32 2, %s24
        %p359 = scmp.lt.s32.totalorder %s358, 3
        %s360 = scalar_select %p359, %s358, 3
        %s361 = smul.addr %s360, 2
        %s362 = scalar_lea.vmem %s1, %s361
        %p363 = pneg %p80
        %p364 = pneg %p77
        %p365 = pneg %p101
        %p366 = pneg %p98
        %p367 = pneg %p122
        %p368 = pneg %p119
        %p369 = pneg %p143
        %p370 = pneg %p140
        %p371 = pneg %p164
        %p372 = pneg %p161
        %p373 = pneg %p185
        %p374 = pneg %p182
        %p375 = pneg %p206
        %p376 = pneg %p203
        %p377 = pneg %p232
        %p378 = pneg %p229
        %p379 = scmp.lt.s32.totalorder %s23, 2
        %s380 = scalar_select %p379, %s23, 2
        %s381 = smul.addr %s380, 2
        %s382 = scalar_lea.vmem %s8, %s381
        %s383 = smul.u32 2, %s24
        %s384 = smul.u32 2, %s24
        %p385 = scmp.lt.s32.totalorder %s384, 3
        %s386 = scalar_select %p385, %s384, 3
        %s387 = smul.addr %s386, 2
        %s388 = scalar_lea.vmem %s1, %s387
        %s389 = smul.u32 2, %s24
        %p390 = scmp.lt.s32.totalorder %s23, 2
        %s391 = scalar_select %p390, %s23, 2
        %s392 = smul.addr %s391, 2
        %s393 = scalar_lea.vmem %s8, %s392
        %p395 = scmp.eq.s32.totalorder %s24, 0
        // Predicated region
        $region91: #{encoder_cnn_forward.1} parent=85 // pred_check
          %p396 = pneg %p395
        $region92: #{encoder_cnn_forward.1} parent=85 // pred_check_branch
          %398 = sbr.rel (%p396) target = $region94
        $region93: #{encoder_cnn_forward.1} parent=85 // pred_region
          %vm399 = vcmask 254976
          %400 = vst.msk [vmem:[#allocation2] sm:$0x3] %vm399, 0.0
        $region94: #{encoder_cnn_forward.1} parent=85 // pred_fallthru
          _
        %v401 = vld [vmem:[%s348] sm:$0xff]
        %v402 = vld [vmem:[%s348 + $0x8] sm:$0xff]
        %v403 = vld [vmem:[%s348 + $0x10] sm:$0xff]
        %v404 = vld [vmem:[%s348 + $0x18] sm:$0xff]
        %v405 = vld [vmem:[%s348 + $0x20] sm:$0x33]
        %v406 = vld [vmem:[%s2] sm:$0xf]
        %v407 = vld [vmem:[%s2 + $0x4] sm:$0xf]
        %v408 = vld [vmem:[%s2 + $0x8] sm:$0xf]
        %v409 = vld [vmem:[%s2 + $0xc] sm:$0xf]
        %v410 = vld [vmem:[%s3] sm:$0xff]
        %v411 = vld [vmem:[%s3 + $0x8] sm:$0xff]
        %v412 = vld [vmem:[%s3 + $0x10] sm:$0xff]
        %v413 = vld [vmem:[%s3 + $0x18] sm:$0xff]
        %415 = vset.pattern.permute.xlu0 0
        %416 = vperm.xlu0 %415, %v410
        %v417 = vpop.permute.xlu0 %416
        %420 = vset.pattern.permute.xlu0 0
        %421 = vperm.xlu0 %420, %v411
        %v422 = vpop.permute.xlu0 %421
        %425 = vset.pattern.permute.xlu0 0
        %426 = vperm.xlu0 %425, %v412
        %v427 = vpop.permute.xlu0 %426
        %430 = vset.pattern.permute.xlu0 0
        %431 = vperm.xlu0 %430, %v413
        %v432 = vpop.permute.xlu0 %431
        %v438 = vunpack.c.l.b16 %v406
        %v439 = vunpack.c.l.b16 %v407
        %v440 = vunpack.c.l.b16 %v408
        %v441 = vunpack.c.l.b16 %v409
        %v442 = vpack.c.b16 %v439, %v438
        %v443 = vpack.c.b16 %v441, %v440
        %v449 = vunpack.c.l.b16 %v401
        %v450 = vunpack.c.h.b16 %v401
        %v451 = vunpack.c.l.b16 %v402
        %v452 = vunpack.c.h.b16 %v402
        %v453 = vunpack.c.l.b16 %v403
        %v454 = vunpack.c.h.b16 %v403
        %v455 = vunpack.c.l.b16 %v404
        %v456 = vunpack.c.h.b16 %v404
        %v457 = vunpack.c.l.b16 %v405
        %v458 = vunpack.c.h.b16 %v405
        %v459 = vpack.c.b16 %v451, %v449
        %v460 = vpack.c.b16 %v452, %v450
        %v461 = vpack.c.b16 %v455, %v453
        %v462 = vpack.c.b16 %v456, %v454
        %v463 = vpack.c.b16 %v457, %v457
        %v464 = vpack.c.b16 %v458, %v458
        %vm469 = vcmask 293888
        %v471 = vsel %vm469, %v442, 0
        %v474 = vsel %vm469, %v443, 0
        %vm476 = vcmask 1041408
        %v478 = vsel %vm476, %v463, 0
        %v481 = vsel %vm476, %v464, 0
        %483 = vmatprep.subr.bf16.mxu0 %v460
        %484 = vmatpush1.bf16.msra.mxu0 %v459
        %485 = vmatprep.subr.bf16.mxu0 %v462
        %486 = vmatpush1.bf16.msra.mxu0 %v461
        %487 = vmatprep.subr.bf16.mxu0 %v481
        %488 = vmatpush1.bf16.msra.mxu0 %v478
        %489 = vmatprep.subr.bf16.mxu0 0
        %490 = vmatpush1.bf16.msra.mxu0 0
        %491 = vmatprep.subr.bf16.mxu0 0
        %492 = vmatpush1.bf16.msra.mxu0 0
        %493 = vmatprep.subr.bf16.mxu0 0
        %494 = vmatpush1.bf16.msra.mxu0 0
        %495 = vmatprep.subr.bf16.mxu0 0
        %496 = vmatpush1.bf16.msra.mxu0 0
        %497 = vmatprep.subr.bf16.mxu0 0
        %498 = vmatpush1.bf16.msra.mxu0 0
        %499 = vmatprep.subr.bf16.mxu0 0
        %500 = vmatpush1.bf16.msra.mxu0 0
        %501 = vmatprep.subr.bf16.mxu0 0
        %502 = vmatpush1.bf16.msra.mxu0 0
        %503 = vmatprep.subr.bf16.mxu0 0
        %504 = vmatpush1.bf16.msra.mxu0 0
        %505 = vmatprep.subr.bf16.mxu0 0
        %506 = vmatpush1.bf16.msra.mxu0 0
        %507 = vmatprep.subr.bf16.mxu0 0
        %508 = vmatpush1.bf16.msra.mxu0 0
        %509 = vmatprep.subr.bf16.mxu0 0
        %510 = vmatpush1.bf16.msra.mxu0 0
        %511 = vmatprep.subr.bf16.mxu0 0
        %512 = vmatpush1.bf16.msra.mxu0 0
        %513 = vmatprep.subr.bf16.mxu0 0
        %514 = vmatpush1.bf16.msra.mxu0 0
        %515 = vmatprep.mubr.bf16.mxu0 0
        %516 = vmatmul.mubr.bf16.gmra.mrb[0].mxu0 %v471
        %v517 = vpop.f32.mrb[0].mxu0
        %v518 = vadd.f32 %v417, %v517
        %v519 = vpop.f32.mrb[0].mxu0
        %v520 = vadd.f32 %v417, %v519
        %v521 = vpop.f32.mrb[0].mxu0
        %v522 = vadd.f32 %v422, %v521
        %v523 = vpop.f32.mrb[0].mxu0
        %v524 = vadd.f32 %v422, %v523
        %525 = vmatprep.mubr.bf16.mxu0 0
        %526 = vmatmul.mubr.bf16.gmra.mrb[0].mxu0 %v474
        %v527 = vpop.f32.mrb[0].mxu0
        %v528 = vadd.f32 %v427, %v527
        %v529 = vpop.f32.mrb[0].mxu0
        %v530 = vadd.f32 %v427, %v529
        %v531 = vpop.f32.mrb[0].mxu0
        %v532 = vadd.f32 %v432, %v531
        %v533 = vpop.f32.mrb[0].mxu0
        %v534 = vadd.f32 %v432, %v533
        %535 = vdwg.mxu0
        %v536 = vmax.f32 %v518, 0.0
        %v537 = vmax.f32 %v520, 0.0
        %v538 = vmax.f32 %v522, 0.0
        %v539 = vmax.f32 %v524, 0.0
        %v540 = vmax.f32 %v528, 0.0
        %v541 = vmax.f32 %v530, 0.0
        %v542 = vmax.f32 %v532, 0.0
        %v543 = vmax.f32 %v534, 0.0
        %v544 = vld [vmem:[#allocation2] sm:$0x3]
        %v545 = vld [vmem:[%s388] sm:$0xf]
        %v548 = vunpack.c.l.s4 1983009808
        %v549 = vunpack.c.0.s8 %v548
        %v550 = vlaneseq
        %v551 = vshrl.u32 %v550, 7
        %v552 = vsub.s32 %v549, %v551
        %v553 = vrot.slane %v545, %v552
        %v554 = vcombine.high %v553, %v553
        %557 = vmatprep.subr.mxu0 %v537
        %558 = vmatpush1.xpose.msra.mxu0 %v536
        %559 = vmatprep.subr.mxu0 %v539
        %560 = vmatpush1.xpose.msra.mxu0 %v538
        %561 = vmatprep.subr.mxu0 %v541
        %562 = vmatpush1.xpose.msra.mxu0 %v540
        %563 = vmatprep.subr.mxu0 %v543
        %564 = vmatpush1.xpose.msra.mxu0 %v542
        %565 = vmatprep.subr.mxu0 0.0
        %566 = vmatpush1.xpose.msra.mxu0 0.0
        %567 = vmatprep.subr.mxu0 0.0
        %568 = vmatpush1.xpose.msra.mxu0 0.0
        %569 = vmatprep.subr.mxu0 0.0
        %570 = vmatpush1.xpose.msra.mxu0 0.0
        %571 = vmatprep.subr.mxu0 0.0
        %572 = vmatpush1.xpose.msra.mxu0 0.0
        %573 = vmatprep.subr.mxu0 0.0
        %574 = vmatpush1.xpose.msra.mxu0 0.0
        %575 = vmatprep.subr.mxu0 0.0
        %576 = vmatpush1.xpose.msra.mxu0 0.0
        %577 = vmatprep.subr.mxu0 0.0
        %578 = vmatpush1.xpose.msra.mxu0 0.0
        %579 = vmatprep.subr.mxu0 0.0
        %580 = vmatpush1.xpose.msra.mxu0 0.0
        %581 = vmatprep.subr.mxu0 0.0
        %582 = vmatpush1.xpose.msra.mxu0 0.0
        %583 = vmatprep.subr.mxu0 0.0
        %584 = vmatpush1.xpose.msra.mxu0 0.0
        %585 = vmatprep.subr.mxu0 0.0
        %586 = vmatpush1.xpose.msra.mxu0 0.0
        %587 = vmatprep.subr.mxu0 0.0
        %588 = vmatpush1.xpose.msra.mxu0 0.0
        %589 = vmatprep.subr.mxu0 0.0
        %590 = vmatpush1.xpose.msra.mxu0 0.0
        %591 = vmatprep.subr.mxu0 0.0
        %592 = vmatpush1.xpose.msra.mxu0 0.0
        %593 = vmatprep.subr.mxu0 0.0
        %594 = vmatpush1.xpose.msra.mxu0 0.0
        %595 = vmatprep.subr.mxu0 0.0
        %596 = vmatpush1.xpose.msra.mxu0 0.0
        %597 = vmatprep.subr.mxu0 0.0
        %598 = vmatpush1.xpose.msra.mxu0 0.0
        %599 = vmatprep.subr.mxu0 0.0
        %600 = vmatpush1.xpose.msra.mxu0 0.0
        %601 = vmatprep.subr.mxu0 0.0
        %602 = vmatpush1.xpose.msra.mxu0 0.0
        %603 = vmatprep.subr.mxu0 0.0
        %604 = vmatpush1.xpose.msra.mxu0 0.0
        %605 = vmatprep.subr.mxu0 0.0
        %606 = vmatpush1.xpose.msra.mxu0 0.0
        %607 = vmatprep.subr.mxu0 0.0
        %608 = vmatpush1.xpose.msra.mxu0 0.0
        %609 = vmatprep.subr.mxu0 0.0
        %610 = vmatpush1.xpose.msra.mxu0 0.0
        %611 = vmatprep.subr.mxu0 0.0
        %612 = vmatpush1.xpose.msra.mxu0 0.0
        %613 = vmatprep.subr.mxu0 0.0
        %614 = vmatpush1.xpose.msra.mxu0 0.0
        %615 = vmatprep.subr.mxu0 0.0
        %616 = vmatpush1.xpose.msra.mxu0 0.0
        %617 = vmatprep.subr.mxu0 0.0
        %618 = vmatpush1.xpose.msra.mxu0 0.0
        %619 = vmatprep.subr.mxu0 0.0
        %620 = vmatpush1.xpose.msra.mxu0 0.0
        %621 = vmatprep.mubr.f32.mxu0 %v554
        %622 = vmatmul.mubr.f32.gmra.mrb[0].mxu0 %v553
        %v623 = vpop.f32.mrb[0].mxu0
        %v624 = vadd.f32 0.0, %v623
        %v625 = vpop.f32.mrb[0].mxu0
        %626 = vdwg.mxu0
        %v627 = vadd.f32 %v544, %v624
        %vm628 = vcmask 254976
        %629 = vst.msk [vmem:[#allocation2] sm:$0x3] %vm628, %v627
        %p630 = scmp.eq.s32.totalorder %s24, 1
        // Predicated region
        $region95: #{encoder_cnn_forward.1} parent=85 // pred_check
          %p631 = pneg %p630
        $region96: #{encoder_cnn_forward.1} parent=85 // pred_check_branch
          %633 = sbr.rel (%p631) target = $region98
        $region97: #{encoder_cnn_forward.1} parent=85 // pred_region
          %v634 = vld [vmem:[#allocation2] sm:$0x3]
          %v635 = vld [vmem:[%s4] sm:$0xff]
          %v636 = vld [vmem:[%s4 + $0x8] sm:$0xff]
          %v637 = vld [vmem:[%s4 + $0x10] sm:$0xff]
          %v638 = vld [vmem:[%s4 + $0x18] sm:$0xff]
          %v639 = vld [vmem:[%s5] sm:$0x1]
          %v641 = vlaneseq
          %v642 = vshrl.u32 %v641, 7
          %v643 = vsub.s32 0, %v642
          %v644 = vrot.slane %v639, %v643
          %vm646 = vcmask 261120
          %v648 = vsel %vm646, %v634, 0
          %650 = vmatprep.subr.mxu0 0.0
          %651 = vmatpush1.msra.mxu0 %v635
          %652 = vmatprep.subr.mxu0 0.0
          %653 = vmatpush1.msra.mxu0 %v636
          %654 = vmatprep.subr.mxu0 0.0
          %655 = vmatpush1.msra.mxu0 %v637
          %656 = vmatprep.subr.mxu0 0.0
          %657 = vmatpush1.msra.mxu0 %v638
          %658 = vmatprep.subr.mxu0 0.0
          %659 = vmatpush1.msra.mxu0 0.0
          %660 = vmatprep.subr.mxu0 0.0
          %661 = vmatpush1.msra.mxu0 0.0
          %662 = vmatprep.subr.mxu0 0.0
          %663 = vmatpush1.msra.mxu0 0.0
          %664 = vmatprep.subr.mxu0 0.0
          %665 = vmatpush1.msra.mxu0 0.0
          %666 = vmatprep.subr.mxu0 0.0
          %667 = vmatpush1.msra.mxu0 0.0
          %668 = vmatprep.subr.mxu0 0.0
          %669 = vmatpush1.msra.mxu0 0.0
          %670 = vmatprep.subr.mxu0 0.0
          %671 = vmatpush1.msra.mxu0 0.0
          %672 = vmatprep.subr.mxu0 0.0
          %673 = vmatpush1.msra.mxu0 0.0
          %674 = vmatprep.subr.mxu0 0.0
          %675 = vmatpush1.msra.mxu0 0.0
          %676 = vmatprep.subr.mxu0 0.0
          %677 = vmatpush1.msra.mxu0 0.0
          %678 = vmatprep.subr.mxu0 0.0
          %679 = vmatpush1.msra.mxu0 0.0
          %680 = vmatprep.subr.mxu0 0.0
          %681 = vmatpush1.msra.mxu0 0.0
          %682 = vmatprep.subr.mxu0 0.0
          %683 = vmatpush1.msra.mxu0 0.0
          %684 = vmatprep.subr.mxu0 0.0
          %685 = vmatpush1.msra.mxu0 0.0
          %686 = vmatprep.subr.mxu0 0.0
          %687 = vmatpush1.msra.mxu0 0.0
          %688 = vmatprep.subr.mxu0 0.0
          %689 = vmatpush1.msra.mxu0 0.0
          %690 = vmatprep.subr.mxu0 0.0
          %691 = vmatpush1.msra.mxu0 0.0
          %692 = vmatprep.subr.mxu0 0.0
          %693 = vmatpush1.msra.mxu0 0.0
          %694 = vmatprep.subr.mxu0 0.0
          %695 = vmatpush1.msra.mxu0 0.0
          %696 = vmatprep.subr.mxu0 0.0
          %697 = vmatpush1.msra.mxu0 0.0
          %698 = vmatprep.subr.mxu0 0.0
          %699 = vmatpush1.msra.mxu0 0.0
          %700 = vmatprep.subr.mxu0 0.0
          %701 = vmatpush1.msra.mxu0 0.0
          %702 = vmatprep.subr.mxu0 0.0
          %703 = vmatpush1.msra.mxu0 0.0
          %704 = vmatprep.subr.mxu0 0.0
          %705 = vmatpush1.msra.mxu0 0.0
          %706 = vmatprep.subr.mxu0 0.0
          %707 = vmatpush1.msra.mxu0 0.0
          %708 = vmatprep.subr.mxu0 0.0
          %709 = vmatpush1.msra.mxu0 0.0
          %710 = vmatprep.subr.mxu0 0.0
          %711 = vmatpush1.msra.mxu0 0.0
          %712 = vmatprep.subr.mxu0 0.0
          %713 = vmatpush1.msra.mxu0 0.0
          %714 = vmatprep.mubr.f32.mxu0 0.0
          %715 = vmatmul.mubr.f32.gmra.mrb[0].mxu0 %v648
          %v716 = vpop.f32.mrb[0].mxu0
          %v717 = vadd.f32 %v644, %v716
          %v718 = vpop.f32.mrb[0].mxu0
          %719 = vdwg.mxu0
          %v720 = vsel %vm476, %v717, 0.0
          %v721 = vrot.slane %v720, 4
          %v722 = vadd.f32 %v720, %v721
          %v723 = vrot.slane %v722, 2
          %v724 = vadd.f32 %v722, %v723
          %v725 = vrot.slane %v724, 1
          %v726 = vadd.f32 %v724, %v725
          %v727 = vrcp.pop 2.0
          %v728 = vmul.f32 %v726, %v727
          %v729 = vsub.f32 %v717, %v728
          %v730 = vmul.f32 %v729, %v729
          %v731 = vsel %vm476, %v730, 0.0
          %v732 = vrot.slane %v731, 4
          %v733 = vadd.f32 %v731, %v732
          %v734 = vrot.slane %v733, 2
          %v735 = vadd.f32 %v733, %v734
          %v736 = vrot.slane %v735, 1
          %v737 = vadd.f32 %v735, %v736
          %v738 = vmul.f32 %v737, %v727
          %v739 = vadd.f32 %v738, 1e-05
          %v740 = vrsqrt.pop %v739
          %v741 = vmul.f32 %v729, %v740
          %v742 = vld [vmem:[%s6] sm:$0x1]
          %v744 = vlaneseq
          %v745 = vshrl.u32 %v744, 7
          %v746 = vsub.s32 0, %v745
          %v747 = vrot.slane %v742, %v746
          %v749 = vmul.f32 %v741, %v747
          %v750 = vld [vmem:[%s7] sm:$0x1]
          %v752 = vlaneseq
          %v753 = vshrl.u32 %v752, 7
          %v754 = vsub.s32 0, %v753
          %v755 = vrot.slane %v750, %v754
          %v757 = vadd.f32 %v749, %v755
          %758 = vst [vmem:[%s393] sm:$0x3] %v757
        $region98: #{encoder_cnn_forward.1} parent=85 // pred_fallthru
          _
        %p759 = scmp.lt.s32.totalorder %s23, 2
        %s760 = scalar_select %p759, %s23, 2
        %s761 = smul.addr %s760, 2
        %s762 = scalar_lea.vmem %s8, %s761
        // Predicated region
        $region99: #{encoder_cnn_forward.1} parent=85 // pred_check
          %p763 = pneg %p229
        $region100: #{encoder_cnn_forward.1} parent=85 // pred_check_branch
          %765 = sbr.rel (%p763) target = $region102
        $region101: #{encoder_cnn_forward.1} parent=85 // pred_region
          _
        $region102: #{encoder_cnn_forward.1} parent=85 // pred_fallthru
          _
      $region86: #{encoder_cnn_forward.1} parent=5 // pred_fallthru
        _
      %p766 = scmp.le.s32.totalorder 2, %s14
      // Predicated region
      $region103: #{encoder_cnn_forward.1} parent=5 // pred_check
        %p767 = pneg %p766
      $region104: #{encoder_cnn_forward.1} parent=5 // pred_check_branch
        %769 = sbr.rel (%p767) target = $region106
      $region105: #{encoder_cnn_forward.1} parent=5 // pred_region
        %s770 = ssub.s32 %s14, 2
        // Predicated region
        $region107: #{encoder_cnn_forward.1} parent=105 // pred_check
          %p771 = pneg %p235
        $region108: #{encoder_cnn_forward.1} parent=105 // pred_check_branch
          %773 = sbr.rel (%p771) target = $region110
        $region109: #{encoder_cnn_forward.1} parent=105 // pred_region
          %p774 = scmp.lt.s32.totalorder %s25, 2
          %s775 = scalar_select %p774, %s25, 2
          %s776 = smul.addr %s775, 2
          %s777 = scalar_lea.vmem %s8, %s776
        $region110: #{encoder_cnn_forward.1} parent=105 // pred_fallthru
          _
      $region106: #{encoder_cnn_forward.1} parent=5 // pred_fallthru
        _
    $region6: #{encoder_cnn_forward.1} parent=1 // loop_footer
      %s18 = sadd.s32 1, %s14
    $region7: #{encoder_cnn_forward.1} parent=1 // loop_footer_branch
      %13 = sbr.rel target = $region3
    $region8: #{encoder_cnn_forward.1} parent=1 // loop_exit
      _

</llo_original>
